<compile_context>
chip_gen: v7x
topology: tpu7x:2x2x1
jax: 0.10.0
libtpu: 0.0.40
codegen_flags: <defaults>
</compile_context>

<pallas_src>
import jax
import jax.numpy as jnp
import numpy as np
from jax.experimental import pallas as pl
from jax.experimental.pallas import tpu as pltpu


def _round_up(x: int, m: int) -> int:
    return ((x + m - 1) // m) * m


def _pick_tile(dim: int, t_max: int, align: int) -> int:
    """Tile size (multiple of `align`, <= ~t_max) for an axis of length `dim`.

    Uses a single full-size (padded) block when it fits; otherwise picks the
    largest halving of t_max whose padding overhead is small (<= ~12.5%),
    falling back to the minimum-padding candidate.
    """
    t_max = max(align, t_max - t_max % align)
    dim_a = _round_up(dim, align)
    if dim_a <= t_max:
        return dim_a
    cands = []
    t = t_max
    while t >= align:
        t_al = max(align, t - t % align)
        if t_al not in cands:
            cands.append(t_al)
        t //= 2
    budget = max(align, dim // 8)
    for t in cands:                          # large -> small
        if _round_up(dim, t) - dim <= budget:
            return t
    return min(cands, key=lambda t: (_round_up(dim, t) - dim, -t))


def _vmem_capacity_bytes() -> int:
    try:
        return int(pltpu.get_tpu_info().vmem_capacity_bytes)
    except Exception:
        return 64 << 20                      # conservative fallback (v7x per-TC)


def _linear_kernel(x_ref, w_ref, b_ref, o_ref):
    """One (tm, tn) output tile of y = x @ W_t + b; K is the last grid axis.

    x_ref: (tm, tk)   w_ref: (tk, tn)   b_ref: (1, tn) f32   o_ref: (tm, tn) f32

    o_ref's index_map ignores k, so the output block stays resident in VMEM
    across the whole K reduction -> accumulate directly into it (no scratch).
    """
    @pl.when(pl.program_id(2) == 0)
    def _():
        # Bias folded into accumulator init: no finalize add needed.
        o_ref[...] = jnp.broadcast_to(b_ref[...], o_ref.shape).astype(o_ref.dtype)

    o_ref[...] += jnp.dot(
        x_ref[...].astype(w_ref.dtype),      # no-op in f32 mode, cast in bf16 mode
        w_ref[...],
        preferred_element_type=jnp.float32,
    )


def make_linear(weight, bias, *, tm=512, tn=512, tk=2048, use_bf16=False):
    """Build a jitted `forward(x)` computing y = x @ weight.T + bias.

    weight: (out, inp), bias: (out,) -- torch.nn.Linear layout.
    All per-parameter work (transpose, padding, optional bf16 cast) is done
    here once, not in the per-call hot path.
    """
    weight = jnp.asarray(weight, jnp.float32)
    bias = jnp.asarray(bias, jnp.float32)
    out_dim, inp = weight.shape

    # N tile: lane (128) multiple minimizing padding of out_dim.
    tn_base = _pick_tile(out_dim, tn, 128)
    n_pad = _round_up(out_dim, tn_base)

    # K: a single full-K block when inp fits one tile (block dim == full array
    # dim is legal even when not 128-divisible) -> zero K padding and no
    # per-call pad of x for small layers; otherwise 128-multiple K tiles.
    if inp <= tk:
        tk_eff, k_pad = inp, inp
    else:
        tk_eff = _pick_tile(inp, tk, 128)
        k_pad = _round_up(inp, tk_eff)

    w_dtype = jnp.bfloat16 if use_bf16 else jnp.float32
    w_t = (jnp.zeros((k_pad, n_pad), w_dtype)
           .at[:inp, :out_dim].set(weight.T.astype(w_dtype)))
    b2 = jnp.zeros((1, n_pad), jnp.float32).at[0, :out_dim].set(bias)

    vmem_cap = _vmem_capacity_bytes()
    x_itemsize = 4
    w_itemsize = jnp.dtype(w_dtype).itemsize

    @jax.jit
    def forward(x):
        batch = x.shape[0]

        # M tile: sublane (8) multiple minimizing padding of batch.
        tm_eff = _pick_tile(batch, tm, 8)
        m_pad = _round_up(batch, tm_eff)
        tn_eff = tn_base

        # v7x has 2 TensorCores sharded over the "parallel" grid axes: make
        # sure the (M, N) parallel grid exposes >= 2 blocks when possible.
        if (m_pad // tm_eff) * (n_pad // tn_eff) < 2:
            if (tn_eff >= 256 and (tn_eff // 2) % 128 == 0
                    and n_pad % (tn_eff // 2) == 0):
                tn_eff //= 2
            elif tm_eff >= 16 and tm_eff % 16 == 0:
                tm_eff //= 2
                m_pad = _round_up(batch, tm_eff)

        pad_m, pad_k = m_pad - batch, k_pad - inp
        x_p = jnp.pad(x, ((0, pad_m), (0, pad_k))) if (pad_m or pad_k) else x

        m_blocks = m_pad // tm_eff
        n_blocks = n_pad // tn_eff
        k_steps = k_pad // tk_eff
        grid = (m_blocks, n_blocks, k_steps)

        # GEMV regime (tiny M, long K): deepen weight pipelining to hide DMA.
        w_bufs = 3 if (tm_eff <= 64 and k_steps > 1) else 2
        if w_bufs == 3:
            w_spec = pl.BlockSpec((tk_eff, tn_eff), lambda i, j, k: (k, j),
                                  pipeline_mode=pl.Buffered(3))
        else:
            w_spec = pl.BlockSpec((tk_eff, tn_eff), lambda i, j, k: (k, j))

        # VMEM limit derived from the actual tiles (+ slack), capped to 75% of
        # this chip's physical VMEM (v7x: 64 MiB, v5e/v6e: 128 MiB).
        tile_bytes = (2 * tm_eff * tk_eff * x_itemsize
                      + w_bufs * tk_eff * tn_eff * w_itemsize
                      + 2 * tm_eff * tn_eff * 4
                      + 2 * tn_eff * 4)
        vmem_limit = int(min(max(tile_bytes + (8 << 20), 32 << 20),
                             (vmem_cap * 3) // 4))

        cost = pl.CostEstimate(
            flops=2 * m_pad * n_pad * k_pad,
            transcendentals=0,
            # Account for grid re-streaming: x read once per N block, W once
            # per M block; output written once; bias per output tile.
            bytes_accessed=(m_pad * k_pad * x_itemsize * n_blocks
                            + k_pad * n_pad * w_itemsize * m_blocks
                            + m_pad * n_pad * 4
                            + n_pad * 4 * m_blocks * n_blocks),
        )

        y_p = pl.pallas_call(
            _linear_kernel,
            out_shape=jax.ShapeDtypeStruct((m_pad, n_pad), jnp.float32),
            grid=grid,
            in_specs=[
                pl.BlockSpec((tm_eff, tk_eff), lambda i, j, k: (i, k)),
                w_spec,
                pl.BlockSpec((1, tn_eff), lambda i, j, k: (0, j)),
            ],
            out_specs=pl.BlockSpec((tm_eff, tn_eff), lambda i, j, k: (i, j)),
            compiler_params=pltpu.CompilerParams(
                dimension_semantics=("parallel", "parallel", "arbitrary"),
                vmem_limit_bytes=vmem_limit,
            ),
            cost_estimate=cost,
        )(x_p, w_t, b2)

        if m_pad != batch or n_pad != out_dim:
            y_p = y_p[:batch, :out_dim]
        return y_p

    return forward


if __name__ == "__main__":
    # Small shapes consistent with the module: batch=8, inp=32, out=16
    B, INP, OUT = 8, 32, 16

    key = jax.random.PRNGKey(0)
    k_x, k_w, k_b = jax.random.split(key, 3)

    # Deterministic init mirroring nn.Linear's uniform(-1/sqrt(inp), 1/sqrt(inp))
    bound = 1.0 / np.sqrt(INP)
    weight = jax.random.uniform(k_w, (OUT, INP), jnp.float32, -bound, bound)
    bias = jax.random.uniform(k_b, (OUT,), jnp.float32, -bound, bound)
    x = jax.random.normal(k_x, (B, INP), jnp.float32)

    y_ref = x @ weight.T + bias

    # Exact fp32 path (matches nn.Linear fp32 numerics).
    linear = make_linear(weight, bias)
    y = jax.block_until_ready(linear(x))
    np.testing.assert_allclose(np.asarray(y), np.asarray(y_ref),
                               rtol=1e-5, atol=1e-5)

    # Opt-in bf16 MXU path (native matmul dtype on v5e/v6e/v7x), f32 accumulation.
    linear_bf16 = make_linear(weight, bias, use_bf16=True)
    y_bf16 = jax.block_until_ready(linear_bf16(x))
    np.testing.assert_allclose(np.asarray(y_bf16), np.asarray(y_ref),
                               rtol=5e-2, atol=5e-2)

    print("KERNEL_OK")
</pallas_src>

<mosaic_0001>
module attributes {stable_mosaic.version = 11 : i64} {
  func.func @_linear_kernel(%arg0: i32, %arg1: i32, %arg2: i32, %arg3: memref<8x32xf32, #tpu.memory_space<vmem>>, %arg4: memref<32x128xf32, #tpu.memory_space<vmem>>, %arg5: memref<1x128xf32, #tpu.memory_space<vmem>>, %arg6: memref<8x128xf32, #tpu.memory_space<vmem>>) attributes {dimension_semantics = [#tpu.dimension_semantics<parallel>, #tpu.dimension_semantics<parallel>, #tpu.dimension_semantics<arbitrary>], iteration_bounds = array<i64: 1, 1, 1>, scalar_prefetch = 0 : i64, scratch_operands = 0 : i64, tpu.core_type = #tpu.core_type<tc>, window_params = [{transform_indices = @transform_0, window_bounds = array<i64: 8, 32>}, {transform_indices = @transform_1, window_bounds = array<i64: 32, 128>}, {transform_indices = @transform_2, window_bounds = array<i64: 1, 128>}, {transform_indices = @transform_3, window_bounds = array<i64: 8, 128>}]} {
    %c0_i32 = arith.constant 0 : i32
    %0 = arith.cmpi eq, %arg2, %c0_i32 : i32
    %1 = arith.extui %0 : i1 to i32
    %c0_i32_0 = arith.constant 0 : i32
    %2 = arith.cmpi ne, %1, %c0_i32_0 : i32
    scf.if %2 {
      %c0_8 = arith.constant 0 : index
      %c0_9 = arith.constant 0 : index
      %9 = vector.load %arg5[%c0_8, %c0_9] : memref<1x128xf32, #tpu.memory_space<vmem>>, vector<1x128xf32>
      %10 = vector.shape_cast %9 : vector<1x128xf32> to vector<1x128xf32>
      %11 = vector.broadcast %10 : vector<1x128xf32> to vector<8x128xf32>
      %c0_10 = arith.constant 0 : index
      %c0_11 = arith.constant 0 : index
      %12 = vector.load %arg6[%c0_10, %c0_11] : memref<8x128xf32, #tpu.memory_space<vmem>>, vector<8x128xf32>
      tpu.vector_store %arg6[%c0_10, %c0_11], %11 {strides = array<i32>} : memref<8x128xf32, #tpu.memory_space<vmem>>, vector<8x128xf32>,
    } else {
    }
    %c0 = arith.constant 0 : index
    %c0_1 = arith.constant 0 : index
    %3 = vector.load %arg6[%c0, %c0_1] : memref<8x128xf32, #tpu.memory_space<vmem>>, vector<8x128xf32>
    %c0_2 = arith.constant 0 : index
    %c0_3 = arith.constant 0 : index
    %4 = vector.load %arg3[%c0_2, %c0_3] : memref<8x32xf32, #tpu.memory_space<vmem>>, vector<8x32xf32>
    %c0_4 = arith.constant 0 : index
    %c0_5 = arith.constant 0 : index
    %5 = vector.load %arg4[%c0_4, %c0_5] : memref<32x128xf32, #tpu.memory_space<vmem>>, vector<32x128xf32>
    %cst = arith.constant dense<0.000000e+00> : vector<8x128xf32>
    %6 = tpu.matmul %4, %5, %cst {dimension_numbers = #tpu.dot_dimension_numbers<[1], [0], [0], [1], [0, 0, 1, 1], [], []>} : vector<8x32xf32>, vector<32x128xf32>, vector<8x128xf32> -> vector<8x128xf32>
    %7 = arith.addf %3, %6 : vector<8x128xf32>
    %c0_6 = arith.constant 0 : index
    %c0_7 = arith.constant 0 : index
    %8 = vector.load %arg6[%c0_6, %c0_7] : memref<8x128xf32, #tpu.memory_space<vmem>>, vector<8x128xf32>
    tpu.vector_store %arg6[%c0_6, %c0_7], %7 {strides = array<i32>} : memref<8x128xf32, #tpu.memory_space<vmem>>, vector<8x128xf32>,
    return
  }
  func.func @transform_0(%arg0: i32, %arg1: i32, %arg2: i32) -> (i32, i32) {
    %c0_i32 = arith.constant 0 : i32
    return %arg0, %arg2 : i32, i32
  }
  func.func @transform_1(%arg0: i32, %arg1: i32, %arg2: i32) -> (i32, i32) {
    %c0_i32 = arith.constant 0 : i32
    return %arg2, %arg1 : i32, i32
  }
  func.func @transform_2(%arg0: i32, %arg1: i32, %arg2: i32) -> (i32, i32) {
    %c0_i32 = arith.constant 0 : i32
    %c0_i32_0 = arith.constant 0 : i32
    return %c0_i32, %arg1 : i32, i32
  }
  func.func @transform_3(%arg0: i32, %arg1: i32, %arg2: i32) -> (i32, i32) {
    %c0_i32 = arith.constant 0 : i32
    return %arg0, %arg1 : i32, i32
  }
}

</mosaic_0001>

<llo_original>
// kernel: forward.1
$region0: #{forward.1}
  #allocation0 [shape = 'u32[]', space=smem, size = 0x4, offset = 0x4, fixed_abs, tag = 'smem constant byte address 0x4 - core index']
  #allocation1 [shape = 'u32[144,128]{1,0:T(1,128)}', space=vmem, size = 0x12000, scoped, tag = 'internal scratch']
  %s0 = inlined_call_operand.hbm [shape: f32[8,32], index: 0, kind: input, shape index: {}]
  %s1 = inlined_call_operand.hbm [shape: f32[32,128], index: 1, kind: input, shape index: {}]
  %s2 = inlined_call_operand.vmem [shape: f32[1,128], index: 2, kind: input, shape index: {}]
  %s3 = inlined_call_operand.hbm [shape: f32[8,128], index: 3, kind: output, shape index: {}]
  %s4 = sld [smem:[#allocation0]]
  $region34: #{forward.1} parent=0
    _
  %s6 = ssub.s32 1, %s4
  %s7 = scalar_select 0, %s6, %s4
  $region1: #{forward.1} parent=0
    #allocation2 [shape = 'u8[4096]{0}', space=vmem, size = 0x1000, scoped, tag = 'input window, operand 0, single buffered']
    #allocation3 [shape = 's32[1]{0}', space=sflag, size = 0x4, scoped, tag = 'scoped memory for forward.1']
    #allocation4 [shape = 's32[1]{0}', space=sflag, size = 0x4, scoped, tag = 'scoped memory for forward.1']
    #allocation5 [shape = 'u8[16384]{0}', space=vmem, size = 0x4000, scoped, tag = 'input window, operand 1, single buffered']
    #allocation6 [shape = 's32[1]{0}', space=sflag, size = 0x4, scoped, tag = 'scoped memory for forward.1']
    #allocation7 [shape = 'u8[4096]{0}', space=vmem, size = 0x1000, scoped, tag = 'output window, operand 0, single buffered']
    %8 = vsyncpa [#allocation3], 0
    %9 = vsyncpa [#allocation6], 0
    %10 = vsyncpa [#allocation4], 0
    // Predicated region
    $region2: #{forward.1} parent=1 // pred_check
      _
    $region3: #{forward.1} parent=1 // pred_check_branch
      %12 = sbr.rel (0) target = $region5
    $region4: #{forward.1} parent=1 // pred_region
      %s14 = ssub.s32 128, 128
      %15 = vsyncadd [#allocation3], %s14
      %s17 = sshll.u32 [#allocation2], 4
      %s18 = int_to_ptr.vmem [resolvable:$true] %s17
      %20 = dma.hbm_to_vmem [thread:$0]  %s0, 128, %s18, [#allocation3]
    $region5: #{forward.1} parent=1 // pred_fallthru
      _
    // Predicated region
    $region6: #{forward.1} parent=1 // pred_check
      _
    $region7: #{forward.1} parent=1 // pred_check_branch
      %22 = sbr.rel (0) target = $region9
    $region8: #{forward.1} parent=1 // pred_region
      %s24 = ssub.s32 512, 512
      %25 = vsyncadd [#allocation6], %s24
      %s26 = sshll.u32 [#allocation5], 4
      %s27 = int_to_ptr.vmem [resolvable:$true] %s26
      %32 = dma.hbm_to_vmem [thread:$0]  %s1, 512, %s27, [#allocation6], 128, 128, 8
    $region9: #{forward.1} parent=1 // pred_fallthru
      _
    // Predicated region
    $region10: #{forward.1} parent=1 // pred_check
      _
    $region11: #{forward.1} parent=1 // pred_check_branch
      %34 = sbr.rel (0) target = $region13
    $region12: #{forward.1} parent=1 // pred_region
      _
    $region13: #{forward.1} parent=1 // pred_fallthru
      _
    // Predicated region
    $region14: #{forward.1} parent=1 // pred_check
      _
    $region15: #{forward.1} parent=1 // pred_check_branch
      %36 = sbr.rel (0) target = $region17
    $region16: #{forward.1} parent=1 // pred_region
      %37 = dma.done [#allocation3], 128
    $region17: #{forward.1} parent=1 // pred_fallthru
      _
    // Predicated region
    $region18: #{forward.1} parent=1 // pred_check
      _
    $region19: #{forward.1} parent=1 // pred_check_branch
      %39 = sbr.rel (0) target = $region21
    $region20: #{forward.1} parent=1 // pred_region
      %40 = dma.done [#allocation6], 512
    $region21: #{forward.1} parent=1 // pred_fallthru
      _
    %p41 = scmp.eq.s32.totalorder 0, 0
    // Predicated region
    $region22: #{forward.1} parent=1 // pred_check
      %p42 = pneg %p41
    $region23: #{forward.1} parent=1 // pred_check_branch
      %44 = sbr.rel (%p42) target = $region25
    $region24: #{forward.1} parent=1 // pred_region
      %v45 = vld [vmem:[%s2] sm:$0x1]
      %v47 = vlaneseq
      %v48 = vshrl.u32 %v47, 7
      %v49 = vsub.s32 0, %v48
      %v50 = vrot.slane %v45, %v49
      %52 = vst [vmem:[#allocation7] sm:$0xff] %v50
    $region25: #{forward.1} parent=1 // pred_fallthru
      _
    %v53 = vld [vmem:[#allocation7] sm:$0xff]
    %v54 = vld [vmem:[#allocation2] sm:$0xff]
    %v55 = vld [vmem:[#allocation5] sm:$0xff]
    %v56 = vld [vmem:[#allocation5 + $0x8] sm:$0xff]
    %v57 = vld [vmem:[#allocation5 + $0x10] sm:$0xff]
    %v58 = vld [vmem:[#allocation5 + $0x18] sm:$0xff]
    %vm59 = vcmask 261120
    %v61 = vsel %vm59, %v54, 0
    %63 = vmatprep.subr.mxu0 0.0
    %64 = vmatpush1.msra.mxu0 %v55
    %65 = vmatprep.subr.mxu0 0.0
    %66 = vmatpush1.msra.mxu0 %v56
    %67 = vmatprep.subr.mxu0 0.0
    %68 = vmatpush1.msra.mxu0 %v57
    %69 = vmatprep.subr.mxu0 0.0
    %70 = vmatpush1.msra.mxu0 %v58
    %71 = vmatprep.subr.mxu0 0.0
    %72 = vmatpush1.msra.mxu0 0.0
    %73 = vmatprep.subr.mxu0 0.0
    %74 = vmatpush1.msra.mxu0 0.0
    %75 = vmatprep.subr.mxu0 0.0
    %76 = vmatpush1.msra.mxu0 0.0
    %77 = vmatprep.subr.mxu0 0.0
    %78 = vmatpush1.msra.mxu0 0.0
    %79 = vmatprep.subr.mxu0 0.0
    %80 = vmatpush1.msra.mxu0 0.0
    %81 = vmatprep.subr.mxu0 0.0
    %82 = vmatpush1.msra.mxu0 0.0
    %83 = vmatprep.subr.mxu0 0.0
    %84 = vmatpush1.msra.mxu0 0.0
    %85 = vmatprep.subr.mxu0 0.0
    %86 = vmatpush1.msra.mxu0 0.0
    %87 = vmatprep.subr.mxu0 0.0
    %88 = vmatpush1.msra.mxu0 0.0
    %89 = vmatprep.subr.mxu0 0.0
    %90 = vmatpush1.msra.mxu0 0.0
    %91 = vmatprep.subr.mxu0 0.0
    %92 = vmatpush1.msra.mxu0 0.0
    %93 = vmatprep.subr.mxu0 0.0
    %94 = vmatpush1.msra.mxu0 0.0
    %95 = vmatprep.subr.mxu0 0.0
    %96 = vmatpush1.msra.mxu0 0.0
    %97 = vmatprep.subr.mxu0 0.0
    %98 = vmatpush1.msra.mxu0 0.0
    %99 = vmatprep.subr.mxu0 0.0
    %100 = vmatpush1.msra.mxu0 0.0
    %101 = vmatprep.subr.mxu0 0.0
    %102 = vmatpush1.msra.mxu0 0.0
    %103 = vmatprep.subr.mxu0 0.0
    %104 = vmatpush1.msra.mxu0 0.0
    %105 = vmatprep.subr.mxu0 0.0
    %106 = vmatpush1.msra.mxu0 0.0
    %107 = vmatprep.subr.mxu0 0.0
    %108 = vmatpush1.msra.mxu0 0.0
    %109 = vmatprep.subr.mxu0 0.0
    %110 = vmatpush1.msra.mxu0 0.0
    %111 = vmatprep.subr.mxu0 0.0
    %112 = vmatpush1.msra.mxu0 0.0
    %113 = vmatprep.subr.mxu0 0.0
    %114 = vmatpush1.msra.mxu0 0.0
    %115 = vmatprep.subr.mxu0 0.0
    %116 = vmatpush1.msra.mxu0 0.0
    %117 = vmatprep.subr.mxu0 0.0
    %118 = vmatpush1.msra.mxu0 0.0
    %119 = vmatprep.subr.mxu0 0.0
    %120 = vmatpush1.msra.mxu0 0.0
    %121 = vmatprep.subr.mxu0 0.0
    %122 = vmatpush1.msra.mxu0 0.0
    %123 = vmatprep.subr.mxu0 0.0
    %124 = vmatpush1.msra.mxu0 0.0
    %125 = vmatprep.subr.mxu0 0.0
    %126 = vmatpush1.msra.mxu0 0.0
    %127 = vmatprep.mubr.f32.mxu0 0.0
    %128 = vmatmul.mubr.f32.gmra.mrb[0].mxu0 %v61
    %v129 = vpop.f32.mrb[0].mxu0
    %v130 = vadd.f32 0.0, %v129
    %v131 = vpop.f32.mrb[0].mxu0
    %132 = vdwg.mxu0
    %v133 = vadd.f32 %v53, %v130
    %134 = vst [vmem:[#allocation7] sm:$0xff] %v133
    // Predicated region
    $region26: #{forward.1} parent=1 // pred_check
      _
    $region27: #{forward.1} parent=1 // pred_check_branch
      %136 = sbr.rel (0) target = $region29
    $region28: #{forward.1} parent=1 // pred_region
      %s138 = ssub.s32 128, 128
      %139 = vsyncadd [#allocation4], %s138
      %s141 = sshll.u32 [#allocation7], 4
      %s142 = int_to_ptr.vmem [resolvable:$true] %s141
      %144 = dma.vmem_to_hbm [thread:$0]  %s142, 128, %s3, [#allocation4]
    $region29: #{forward.1} parent=1 // pred_fallthru
      _
    // Predicated region
    $region30: #{forward.1} parent=1 // pred_check
      _
    $region31: #{forward.1} parent=1 // pred_check_branch
      %146 = sbr.rel (0) target = $region33
    $region32: #{forward.1} parent=1 // pred_region
      %147 = dma.done [#allocation4], 128
    $region33: #{forward.1} parent=1 // pred_fallthru
      _
    %148 = vsyncpa [#allocation3], 1
    %149 = vsyncpa [#allocation6], 1
    %150 = vsyncpa [#allocation4], 1

</llo_original>
